<compile_context>
chip_gen: v5e
topology: v5e:2x2
jax: 0.10.0
libtpu: 0.0.40
codegen_flags: <defaults>
</compile_context>

<pallas_src>
import functools

import jax
import jax.numpy as jnp
from jax import lax
from jax.experimental import pallas as pl
from jax.experimental.pallas import tpu as pltpu


def _task_classifier_kernel(n_q, n_t, h, nt_pad,
                            x_ref, w_ref, b_ref, itemp_ref,
                            ids_ref, scores_ref, qemb_ref,
                            emb_scr, tpad_scr):
    x = x_ref[...]                                # (n_q + n_t, D) f32
    w = w_ref[...]                                # (D, 2H) f32
    b = b_ref[...]                                # (1, 2H) f32

    # --- fused encoder: one MXU pass, 128-lane-wide result ---------------------
    emb_scr[...] = jnp.dot(x, w, preferred_element_type=jnp.float32) + b

    # Slice via the scratch ref (static offsets -> cheap masked/offset loads).
    q_emb = emb_scr[0:n_q, 0:h]                   # (n_q, H)  = queries @ Wq + bq
    t_emb = emb_scr[n_q:n_q + n_t, h:2 * h]       # (n_t, H)  = tasks   @ Wt + bt

    # --- F.normalize(p=2, dim=1): x / max(||x||, 1e-12)  via rsqrt -------------
    eps2 = jnp.float32(1e-24)                     # (1e-12)^2
    q_norm = q_emb * lax.rsqrt(
        jnp.maximum(jnp.sum(q_emb * q_emb, axis=1, keepdims=True), eps2))
    t_norm = t_emb * lax.rsqrt(
        jnp.maximum(jnp.sum(t_emb * t_emb, axis=1, keepdims=True), eps2))

    # --- pad task embeddings to nt_pad rows so scores are 128-lane dense -------
    tpad_scr[...] = jnp.zeros((nt_pad, h), jnp.float32)
    tpad_scr[0:n_t, :] = t_norm
    t_pad = tpad_scr[...]                         # (nt_pad, H)

    # --- cosine similarities: contract last dims, no explicit transpose --------
    s = lax.dot_general(q_norm, t_pad,
                        (((1,), (1,)), ((), ())),
                        preferred_element_type=jnp.float32)   # (n_q, nt_pad)
    s = s * itemp_ref[0, 0]                       # multiply by 1/temp (SMEM scalar)

    col = lax.broadcasted_iota(jnp.int32, s.shape, 1)
    s = jnp.where(col < n_t, s, jnp.float32(-1e30))   # mask padded task columns

    # --- argmax on the raw logits (softmax is monotone); first-max like torch --
    s_max = jnp.max(s, axis=1, keepdims=True)
    ids = jnp.min(jnp.where(s == s_max, col, jnp.int32(nt_pad)),
                  axis=1, keepdims=True)          # (n_q, 1)

    # --- temperature softmax over the task dimension ----------------------------
    e = jnp.exp(s - s_max)                        # padded lanes underflow to 0
    probs = e * pl.reciprocal(jnp.sum(e, axis=1, keepdims=True), approx=False)

    ids_ref[...] = ids.astype(jnp.int32)
    scores_ref[...] = probs                       # full 128-lane store
    qemb_ref[...] = q_norm


def task_classifier_forward(queries, tasks, wq, bq, wt, bt, temp=1.0):
    n_q, d = queries.shape
    n_t, _ = tasks.shape
    h = wq.shape[1]
    nt_pad = 128                                  # lane-dense scores width

    # Layout plumbing for the fused encoder (tiny XLA ops outside the kernel).
    x = jnp.concatenate([queries, tasks], axis=0).astype(jnp.float32)    # (n_q+n_t, D)
    w = jnp.concatenate([wq, wt], axis=1).astype(jnp.float32)            # (D, 2H)
    b = jnp.concatenate([bq, bt]).reshape(1, 2 * h).astype(jnp.float32)  # (1, 2H)
    inv_temp = jnp.reshape(1.0 / jnp.asarray(temp, jnp.float32), (1, 1)) # (1,1) SMEM scalar

    flops = 2 * (n_q + n_t) * d * (2 * h) + 2 * n_q * nt_pad * h
    transcendentals = n_q * nt_pad + (n_q + n_t) + n_q
    bytes_accessed = (x.size + w.size + b.size + 1) * 4 \
        + (n_q * 1 + n_q * nt_pad + n_q * h) * 4

    vmem = pl.BlockSpec(memory_space=pltpu.MemorySpace.VMEM)
    smem = pl.BlockSpec(memory_space=pltpu.MemorySpace.SMEM)

    ids2d, scores_pad, q_emb = pl.pallas_call(
        functools.partial(_task_classifier_kernel, n_q, n_t, h, nt_pad),
        out_shape=(
            jax.ShapeDtypeStruct((n_q, 1), jnp.int32),
            jax.ShapeDtypeStruct((n_q, nt_pad), jnp.float32),
            jax.ShapeDtypeStruct((n_q, h), jnp.float32),
        ),
        in_specs=[vmem, vmem, vmem, smem],
        out_specs=(vmem, vmem, vmem),
        scratch_shapes=[
            pltpu.VMEM((n_q + n_t, 2 * h), jnp.float32),   # fused embedding slab
            pltpu.VMEM((nt_pad, h), jnp.float32),          # padded t_norm
        ],
        cost_estimate=pl.CostEstimate(
            flops=flops,
            transcendentals=transcendentals,
            bytes_accessed=bytes_accessed),
    )(x, w, b, inv_temp)

    return ids2d.reshape(n_q), scores_pad[:, :n_t], q_emb


def _reference(queries, tasks, wq, bq, wt, bt, temp=1.0):
    qe = queries @ wq + bq
    te = tasks @ wt + bt
    qe = qe / jnp.maximum(jnp.linalg.norm(qe, axis=1, keepdims=True), 1e-12)
    te = te / jnp.maximum(jnp.linalg.norm(te, axis=1, keepdims=True), 1e-12)
    s = jax.nn.softmax((qe @ te.T) / temp, axis=1)
    return jnp.argmax(s, axis=1), s, qe


if __name__ == "__main__":
    # Small shapes consistent with the module: input_dim=384, hidden_dim=64.
    N_Q, N_T, D, H = 8, 6, 384, 64
    TEMP = 1.0

    key = jax.random.PRNGKey(0)
    k1, k2, k3, k4, k5, k6 = jax.random.split(key, 6)

    queries = jax.random.normal(k1, (N_Q, D), dtype=jnp.float32)
    tasks = jax.random.normal(k2, (N_T, D), dtype=jnp.float32)

    # Deterministic Linear params (PyTorch-style uniform(-1/sqrt(D), 1/sqrt(D))),
    # stored as (D, H) — i.e. already transposed relative to nn.Linear.weight.
    bound = 1.0 / (D ** 0.5)
    wq = jax.random.uniform(k3, (D, H), jnp.float32, -bound, bound)
    bq = jax.random.uniform(k4, (H,), jnp.float32, -bound, bound)
    wt = jax.random.uniform(k5, (D, H), jnp.float32, -bound, bound)
    bt = jax.random.uniform(k6, (H,), jnp.float32, -bound, bound)

    ids, scores, q_emb = task_classifier_forward(queries, tasks, wq, bq, wt, bt, TEMP)
    jax.block_until_ready((ids, scores, q_emb))

    ref_ids, ref_scores, ref_qemb = _reference(queries, tasks, wq, bq, wt, bt, TEMP)
    assert ids.shape == (N_Q,) and scores.shape == (N_Q, N_T) and q_emb.shape == (N_Q, H)
    assert jnp.all(ids == ref_ids)
    assert jnp.allclose(scores, ref_scores, atol=1e-5)
    assert jnp.allclose(q_emb, ref_qemb, atol=1e-5)

    print("KERNEL_OK")
</pallas_src>

<mosaic_0001>
module attributes {stable_mosaic.version = 11 : i64} {
  func.func @_task_classifier_kernel(%arg0: memref<14x384xf32, #tpu.memory_space<vmem>>, %arg1: memref<384x128xf32, #tpu.memory_space<vmem>>, %arg2: memref<1x128xf32, #tpu.memory_space<vmem>>, %arg3: memref<1x1xf32, #tpu.memory_space<smem>>, %arg4: memref<8x1xi32, #tpu.memory_space<vmem>>, %arg5: memref<8x128xf32, #tpu.memory_space<vmem>>, %arg6: memref<8x64xf32, #tpu.memory_space<vmem>>, %arg7: memref<14x128xf32, #tpu.memory_space<vmem>>, %arg8: memref<128x64xf32, #tpu.memory_space<vmem>>) attributes {dimension_semantics = [], scalar_prefetch = 0 : i64, scratch_operands = 2 : i64, tpu.core_type = #tpu.core_type<tc>} {
    %c0 = arith.constant 0 : index
    %c0_0 = arith.constant 0 : index
    %0 = vector.load %arg0[%c0, %c0_0] : memref<14x384xf32, #tpu.memory_space<vmem>>, vector<14x384xf32>
    %c0_1 = arith.constant 0 : index
    %c0_2 = arith.constant 0 : index
    %1 = vector.load %arg1[%c0_1, %c0_2] : memref<384x128xf32, #tpu.memory_space<vmem>>, vector<384x128xf32>
    %c0_3 = arith.constant 0 : index
    %c0_4 = arith.constant 0 : index
    %2 = vector.load %arg2[%c0_3, %c0_4] : memref<1x128xf32, #tpu.memory_space<vmem>>, vector<1x128xf32>
    %cst = arith.constant dense<0.000000e+00> : vector<14x128xf32>
    %3 = tpu.matmul %0, %1, %cst {dimension_numbers = #tpu.dot_dimension_numbers<[1], [0], [0], [1], [0, 0, 1, 1], [], []>} : vector<14x384xf32>, vector<384x128xf32>, vector<14x128xf32> -> vector<14x128xf32>
    %4 = vector.broadcast %2 : vector<1x128xf32> to vector<14x128xf32>
    %5 = arith.addf %3, %4 : vector<14x128xf32>
    %c0_5 = arith.constant 0 : index
    %c0_6 = arith.constant 0 : index
    %6 = vector.load %arg7[%c0_5, %c0_6] : memref<14x128xf32, #tpu.memory_space<vmem>>, vector<14x128xf32>
    tpu.vector_store %arg7[%c0_5, %c0_6], %5 {strides = array<i32>} : memref<14x128xf32, #tpu.memory_space<vmem>>, vector<14x128xf32>,
    %c0_7 = arith.constant 0 : index
    %c0_8 = arith.constant 0 : index
    %7 = vector.load %arg7[%c0_7, %c0_8] : memref<14x128xf32, #tpu.memory_space<vmem>>, vector<8x64xf32>
    %c8 = arith.constant 8 : index
    %c64 = arith.constant 64 : index
    %8 = vector.load %arg7[%c8, %c64] : memref<14x128xf32, #tpu.memory_space<vmem>>, vector<6x64xf32>
    %9 = arith.mulf %7, %7 : vector<8x64xf32>
    %cst_9 = arith.constant dense<0.000000e+00> : vector<8xf32>
    %10 = vector.multi_reduction <add>, %9, %cst_9 [1] : vector<8x64xf32> to vector<8xf32>
    %11 = vector.shape_cast %10 : vector<8xf32> to vector<8x1xf32>
    %cst_10 = arith.constant 1.000000e-24 : f32
    %12 = vector.broadcast %cst_10 : f32 to vector<8x1xf32>
    %13 = arith.maximumf %11, %12 : vector<8x1xf32>
    %14 = math.rsqrt %13 : vector<8x1xf32>
    %15 = vector.broadcast %14 : vector<8x1xf32> to vector<8x64xf32>
    %16 = arith.mulf %7, %15 : vector<8x64xf32>
    %17 = arith.mulf %8, %8 : vector<6x64xf32>
    %cst_11 = arith.constant dense<0.000000e+00> : vector<6xf32>
    %18 = vector.multi_reduction <add>, %17, %cst_11 [1] : vector<6x64xf32> to vector<6xf32>
    %19 = vector.shape_cast %18 : vector<6xf32> to vector<6x1xf32>
    %cst_12 = arith.constant 1.000000e-24 : f32
    %20 = vector.broadcast %cst_12 : f32 to vector<6x1xf32>
    %21 = arith.maximumf %19, %20 : vector<6x1xf32>
    %22 = math.rsqrt %21 : vector<6x1xf32>
    %23 = vector.broadcast %22 : vector<6x1xf32> to vector<6x64xf32>
    %24 = arith.mulf %8, %23 : vector<6x64xf32>
    %cst_13 = arith.constant 0.000000e+00 : f32
    %25 = vector.broadcast %cst_13 : f32 to vector<128x64xf32>
    %c0_14 = arith.constant 0 : index
    %c0_15 = arith.constant 0 : index
    %26 = vector.load %arg8[%c0_14, %c0_15] : memref<128x64xf32, #tpu.memory_space<vmem>>, vector<128x64xf32>
    tpu.vector_store %arg8[%c0_14, %c0_15], %25 {strides = array<i32>} : memref<128x64xf32, #tpu.memory_space<vmem>>, vector<128x64xf32>,
    %c0_16 = arith.constant 0 : index
    %c0_17 = arith.constant 0 : index
    %27 = vector.load %arg8[%c0_16, %c0_17] : memref<128x64xf32, #tpu.memory_space<vmem>>, vector<6x64xf32>
    tpu.vector_store %arg8[%c0_16, %c0_17], %24 {strides = array<i32>} : memref<128x64xf32, #tpu.memory_space<vmem>>, vector<6x64xf32>,
    %c0_18 = arith.constant 0 : index
    %c0_19 = arith.constant 0 : index
    %28 = vector.load %arg8[%c0_18, %c0_19] : memref<128x64xf32, #tpu.memory_space<vmem>>, vector<128x64xf32>
    %cst_20 = arith.constant dense<0.000000e+00> : vector<8x128xf32>
    %29 = tpu.matmul %16, %28, %cst_20 {dimension_numbers = #tpu.dot_dimension_numbers<[1], [1], [0], [0], [0, 0, 1, 0], [], []>} : vector<8x64xf32>, vector<128x64xf32>, vector<8x128xf32> -> vector<8x128xf32>
    %c0_21 = arith.constant 0 : index
    %c0_22 = arith.constant 0 : index
    %30 = memref.load %arg3[%c0_21, %c0_22] : memref<1x1xf32, #tpu.memory_space<smem>>
    %31 = vector.broadcast %30 : f32 to vector<8x128xf32>
    %32 = arith.mulf %29, %31 : vector<8x128xf32>
    %33 = tpu.iota {dimensions = array<i32: 1>} : vector<8x128xi32>
    %c6_i32 = arith.constant 6 : i32
    %34 = vector.broadcast %c6_i32 : i32 to vector<8x128xi32>
    %35 = arith.cmpi slt, %33, %34 : vector<8x128xi32>
    %cst_23 = arith.constant -1.000000e+30 : f32
    %36 = vector.broadcast %cst_23 : f32 to vector<8x128xf32>
    %37 = arith.select %35, %32, %36 : vector<8x128xi1>, vector<8x128xf32>
    %cst_24 = arith.constant dense<0xFF800000> : vector<8xf32>
    %38 = vector.multi_reduction <maximumf>, %37, %cst_24 [1] : vector<8x128xf32> to vector<8xf32>
    %39 = vector.shape_cast %38 : vector<8xf32> to vector<8x1xf32>
    %40 = vector.broadcast %39 : vector<8x1xf32> to vector<8x128xf32>
    %41 = arith.cmpf oeq, %37, %40 : vector<8x128xf32>
    %c128_i32 = arith.constant 128 : i32
    %42 = vector.broadcast %c128_i32 : i32 to vector<8x128xi32>
    %43 = arith.select %41, %33, %42 : vector<8x128xi1>, vector<8x128xi32>
    %cst_25 = arith.constant dense<2147483647> : vector<8xi32>
    %44 = vector.multi_reduction <minsi>, %43, %cst_25 [1] : vector<8x128xi32> to vector<8xi32>
    %45 = vector.shape_cast %44 : vector<8xi32> to vector<8x1xi32>
    %46 = vector.broadcast %39 : vector<8x1xf32> to vector<8x128xf32>
    %47 = arith.subf %37, %46 : vector<8x128xf32>
    %48 = math.exp %47 : vector<8x128xf32>
    %cst_26 = arith.constant dense<0.000000e+00> : vector<8xf32>
    %49 = vector.multi_reduction <add>, %48, %cst_26 [1] : vector<8x128xf32> to vector<8xf32>
    %50 = vector.shape_cast %49 : vector<8xf32> to vector<8x1xf32>
    %51 = tpu.reciprocal %50 : vector<8x1xf32> -> vector<8x1xf32>
    %52 = vector.broadcast %51 : vector<8x1xf32> to vector<8x128xf32>
    %53 = arith.mulf %48, %52 : vector<8x128xf32>
    %c0_27 = arith.constant 0 : index
    %c0_28 = arith.constant 0 : index
    %54 = vector.load %arg4[%c0_27, %c0_28] : memref<8x1xi32, #tpu.memory_space<vmem>>, vector<8x1xi32>
    tpu.vector_store %arg4[%c0_27, %c0_28], %45 {strides = array<i32>} : memref<8x1xi32, #tpu.memory_space<vmem>>, vector<8x1xi32>,
    %c0_29 = arith.constant 0 : index
    %c0_30 = arith.constant 0 : index
    %55 = vector.load %arg5[%c0_29, %c0_30] : memref<8x128xf32, #tpu.memory_space<vmem>>, vector<8x128xf32>
    tpu.vector_store %arg5[%c0_29, %c0_30], %53 {strides = array<i32>} : memref<8x128xf32, #tpu.memory_space<vmem>>, vector<8x128xf32>,
    %c0_31 = arith.constant 0 : index
    %c0_32 = arith.constant 0 : index
    %56 = vector.load %arg6[%c0_31, %c0_32] : memref<8x64xf32, #tpu.memory_space<vmem>>, vector<8x64xf32>
    tpu.vector_store %arg6[%c0_31, %c0_32], %16 {strides = array<i32>} : memref<8x64xf32, #tpu.memory_space<vmem>>, vector<8x64xf32>,
    return
  }
}

</mosaic_0001>

<llo_original>
// kernel: tpu_custom_call.1
$region0: #{tpu_custom_call.1}
  #allocation0 [shape = 'u32[]', space=smem, size = 0x4, offset = 0x4, fixed_abs, tag = 'smem constant byte address 0x4 - core index']
  #allocation1 [shape = 'u32[72,128]{1,0:T(1,128)}', space=vmem, size = 0x9000, scoped, tag = 'internal scratch']
  #allocation2 [shape = 'f32[14,128]{1,0:T(8,128)}', space=vmem, size = 0x2000, scoped, tag = 'scratch operand']
  #allocation3 [shape = 'f32[128,64]{1,0:T(8,128)}', space=vmem, size = 0x10000, scoped, tag = 'scratch operand']
  #allocation4 [shape = 'f32[1,1]{1,0:T(1,128)S(6)}', space=smem, size = 0x200, scoped, tag = 'scoped memory for tpu_custom_call.1']
  %s0 = inlined_call_operand.hbm [shape: f32[14,384], index: 0, kind: input, shape index: {}]
  %s1 = inlined_call_operand.hbm [shape: f32[384,128], index: 1, kind: input, shape index: {}]
  %s2 = inlined_call_operand.vmem [shape: f32[1,128], index: 2, kind: input, shape index: {}]
  %s3 = inlined_call_operand.<no memory space> [shape: f32[1,1], index: 3, kind: input, shape index: {}]
  %s4 = inlined_call_operand.vmem [shape: s32[8,1], index: 4, kind: output, shape index: {0}]
  %s5 = inlined_call_operand.hbm [shape: f32[8,128], index: 5, kind: output, shape index: {1}]
  %s6 = inlined_call_operand.hbm [shape: f32[8,64], index: 6, kind: output, shape index: {2}]
  %7 = xla_tuple %s4, %s5, %s6
  %s8 = sld [smem:[#allocation0]]
  $region50: #{tpu_custom_call.1} parent=0
    _
  %s10 = ssub.s32 1, %s8
  %s11 = scalar_select 0, %s10, %s8
  %12 = sst [smem:[#allocation4]] %s3
  $region1: #{tpu_custom_call.1} parent=0
    #allocation5 [shape = 'u8[24576]{0}', space=vmem, size = 0x6000, scoped, tag = 'input window, operand 0, single buffered']
    #allocation6 [shape = 's32[1]{0}', space=sflag, size = 0x4, scoped, tag = 'scoped memory for tpu_custom_call.1']
    #allocation7 [shape = 's32[1]{0}', space=sflag, size = 0x4, scoped, tag = 'scoped memory for tpu_custom_call.1']
    #allocation8 [shape = 'u8[196608]{0}', space=vmem, size = 0x30000, scoped, tag = 'input window, operand 1, single buffered']
    #allocation9 [shape = 's32[1]{0}', space=sflag, size = 0x4, scoped, tag = 'scoped memory for tpu_custom_call.1']
    #allocation10 [shape = 'u8[4096]{0}', space=vmem, size = 0x1000, scoped, tag = 'output window, operand 1, single buffered']
    #allocation11 [shape = 'u8[4096]{0}', space=vmem, size = 0x1000, scoped, tag = 'output window, operand 2, single buffered']
    #allocation12 [shape = 's32[1]{0}', space=sflag, size = 0x4, scoped, tag = 'scoped memory for tpu_custom_call.1']
    %13 = vsyncpa [#allocation6], 0
    %14 = vsyncpa [#allocation9], 0
    %15 = vsyncpa [#allocation7], 0
    %16 = vsyncpa [#allocation12], 0
    // Predicated region
    $region2: #{tpu_custom_call.1} parent=1 // pred_check
      _
    $region3: #{tpu_custom_call.1} parent=1 // pred_check_branch
      %18 = sbr.rel (0) target = $region5
    $region4: #{tpu_custom_call.1} parent=1 // pred_region
      %20 = vsyncadd [#allocation6], 0
      %s21 = sshll.u32 %s0, 4
      %s22 = int_to_ptr.hbm [resolvable:$true] %s21
      %s23 = sshll.u32 [#allocation5], 4
      %s24 = int_to_ptr.vmem [resolvable:$true] %s23
      %29 = dma.hbm_to_vmem [thread:$0]  %s22, 768, %s24, [#allocation6], 384, 384, 24
    $region5: #{tpu_custom_call.1} parent=1 // pred_fallthru
      _
    // Predicated region
    $region6: #{tpu_custom_call.1} parent=1 // pred_check
      _
    $region7: #{tpu_custom_call.1} parent=1 // pred_check_branch
      %31 = sbr.rel (0) target = $region9
    $region8: #{tpu_custom_call.1} parent=1 // pred_region
      %33 = vsyncadd [#allocation9], 0
      %s34 = sshll.u32 %s1, 4
      %s35 = int_to_ptr.hbm [resolvable:$true] %s34
      %s36 = sshll.u32 [#allocation8], 4
      %s37 = int_to_ptr.vmem [resolvable:$true] %s36
      %42 = dma.hbm_to_vmem [thread:$0]  %s35, 6144, %s37, [#allocation9], 128, 128, 8
    $region9: #{tpu_custom_call.1} parent=1 // pred_fallthru
      _
    // Predicated region
    $region10: #{tpu_custom_call.1} parent=1 // pred_check
      _
    $region11: #{tpu_custom_call.1} parent=1 // pred_check_branch
      %44 = sbr.rel (0) target = $region13
    $region12: #{tpu_custom_call.1} parent=1 // pred_region
      _
    $region13: #{tpu_custom_call.1} parent=1 // pred_fallthru
      _
    // Predicated region
    $region14: #{tpu_custom_call.1} parent=1 // pred_check
      _
    $region15: #{tpu_custom_call.1} parent=1 // pred_check_branch
      %46 = sbr.rel (0) target = $region17
    $region16: #{tpu_custom_call.1} parent=1 // pred_region
      _
    $region17: #{tpu_custom_call.1} parent=1 // pred_fallthru
      _
    // Predicated region
    $region18: #{tpu_custom_call.1} parent=1 // pred_check
      _
    $region19: #{tpu_custom_call.1} parent=1 // pred_check_branch
      %48 = sbr.rel (0) target = $region21
    $region20: #{tpu_custom_call.1} parent=1 // pred_region
      %50 = dma.done [#allocation6], 768
    $region21: #{tpu_custom_call.1} parent=1 // pred_fallthru
      _
    // Predicated region
    $region22: #{tpu_custom_call.1} parent=1 // pred_check
      _
    $region23: #{tpu_custom_call.1} parent=1 // pred_check_branch
      %52 = sbr.rel (0) target = $region25
    $region24: #{tpu_custom_call.1} parent=1 // pred_region
      %54 = dma.done [#allocation9], 6144
    $region25: #{tpu_custom_call.1} parent=1 // pred_fallthru
      _
    %v55 = vld [vmem:[#allocation5] sm:$0xff]
    %v56 = vld [vmem:[#allocation5 + $0x8] sm:$0xff]
    %v57 = vld [vmem:[#allocation5 + $0x10] sm:$0xff]
    %v58 = vld [vmem:[#allocation5 + $0x18] sm:$0x3f]
    %v59 = vld [vmem:[#allocation5 + $0x20] sm:$0x3f]
    %v60 = vld [vmem:[#allocation5 + $0x28] sm:$0x3f]
    %v61 = vld [vmem:[#allocation8] sm:$0xff]
    %v62 = vld [vmem:[#allocation8 + $0x8] sm:$0xff]
    %v63 = vld [vmem:[#allocation8 + $0x10] sm:$0xff]
    %v64 = vld [vmem:[#allocation8 + $0x18] sm:$0xff]
    %v65 = vld [vmem:[#allocation8 + $0x20] sm:$0xff]
    %v66 = vld [vmem:[#allocation8 + $0x28] sm:$0xff]
    %v67 = vld [vmem:[#allocation8 + $0x30] sm:$0xff]
    %v68 = vld [vmem:[#allocation8 + $0x38] sm:$0xff]
    %v69 = vld [vmem:[#allocation8 + $0x40] sm:$0xff]
    %v70 = vld [vmem:[#allocation8 + $0x48] sm:$0xff]
    %v71 = vld [vmem:[#allocation8 + $0x50] sm:$0xff]
    %v72 = vld [vmem:[#allocation8 + $0x58] sm:$0xff]
    %v73 = vld [vmem:[#allocation8 + $0x60] sm:$0xff]
    %v74 = vld [vmem:[#allocation8 + $0x68] sm:$0xff]
    %v75 = vld [vmem:[#allocation8 + $0x70] sm:$0xff]
    %v76 = vld [vmem:[#allocation8 + $0x78] sm:$0xff]
    %v77 = vld [vmem:[#allocation8 + $0x80] sm:$0xff]
    %v78 = vld [vmem:[#allocation8 + $0x88] sm:$0xff]
    %v79 = vld [vmem:[#allocation8 + $0x90] sm:$0xff]
    %v80 = vld [vmem:[#allocation8 + $0x98] sm:$0xff]
    %v81 = vld [vmem:[#allocation8 + $0xa0] sm:$0xff]
    %v82 = vld [vmem:[#allocation8 + $0xa8] sm:$0xff]
    %v83 = vld [vmem:[#allocation8 + $0xb0] sm:$0xff]
    %v84 = vld [vmem:[#allocation8 + $0xb8] sm:$0xff]
    %v85 = vld [vmem:[#allocation8 + $0xc0] sm:$0xff]
    %v86 = vld [vmem:[#allocation8 + $0xc8] sm:$0xff]
    %v87 = vld [vmem:[#allocation8 + $0xd0] sm:$0xff]
    %v88 = vld [vmem:[#allocation8 + $0xd8] sm:$0xff]
    %v89 = vld [vmem:[#allocation8 + $0xe0] sm:$0xff]
    %v90 = vld [vmem:[#allocation8 + $0xe8] sm:$0xff]
    %v91 = vld [vmem:[#allocation8 + $0xf0] sm:$0xff]
    %v92 = vld [vmem:[#allocation8 + $0xf8] sm:$0xff]
    %v93 = vld [vmem:[#allocation8 + $0x100] sm:$0xff]
    %v94 = vld [vmem:[#allocation8 + $0x108] sm:$0xff]
    %v95 = vld [vmem:[#allocation8 + $0x110] sm:$0xff]
    %v96 = vld [vmem:[#allocation8 + $0x118] sm:$0xff]
    %v97 = vld [vmem:[#allocation8 + $0x120] sm:$0xff]
    %v98 = vld [vmem:[#allocation8 + $0x128] sm:$0xff]
    %v99 = vld [vmem:[#allocation8 + $0x130] sm:$0xff]
    %v100 = vld [vmem:[#allocation8 + $0x138] sm:$0xff]
    %v101 = vld [vmem:[#allocation8 + $0x140] sm:$0xff]
    %v102 = vld [vmem:[#allocation8 + $0x148] sm:$0xff]
    %v103 = vld [vmem:[#allocation8 + $0x150] sm:$0xff]
    %v104 = vld [vmem:[#allocation8 + $0x158] sm:$0xff]
    %v105 = vld [vmem:[#allocation8 + $0x160] sm:$0xff]
    %v106 = vld [vmem:[#allocation8 + $0x168] sm:$0xff]
    %v107 = vld [vmem:[#allocation8 + $0x170] sm:$0xff]
    %v108 = vld [vmem:[#allocation8 + $0x178] sm:$0xff]
    %v109 = vld [vmem:[%s2] sm:$0x1]
    %v111 = vperm.slane %v109, 0
    %113 = vmatpush.msra.mxu0 %v76
    %114 = vmatpush.msra.mxu0 %v75
    %115 = vmatpush.msra.mxu0 %v74
    %116 = vmatpush.msra.mxu0 %v73
    %117 = vmatpush.msra.mxu0 %v72
    %118 = vmatpush.msra.mxu0 %v71
    %119 = vmatpush.msra.mxu0 %v70
    %120 = vmatpush.msra.mxu0 %v69
    %121 = vmatpush.msra.mxu0 %v68
    %122 = vmatpush.msra.mxu0 %v67
    %123 = vmatpush.msra.mxu0 %v66
    %124 = vmatpush.msra.mxu0 %v65
    %125 = vmatpush.msra.mxu0 %v64
    %126 = vmatpush.msra.mxu0 %v63
    %127 = vmatpush.msra.mxu0 %v62
    %128 = vmatpush.msra.mxu0 %v61
    %129 = vmatmul.f32.gmra.mxu0 %v55
    %v130 = vpop.f32.mrf.mxu0
    %v131 = vadd.f32 %v111, %v130
    %132 = vmatmul.f32.gmra.mxu0 %v58
    %v133 = vpop.f32.mrf.mxu0
    %v134 = vadd.f32 %v111, %v133
    %135 = vdwg.mxu0
    %136 = vmatpush.msra.mxu0 %v92
    %137 = vmatpush.msra.mxu0 %v91
    %138 = vmatpush.msra.mxu0 %v90
    %139 = vmatpush.msra.mxu0 %v89
    %140 = vmatpush.msra.mxu0 %v88
    %141 = vmatpush.msra.mxu0 %v87
    %142 = vmatpush.msra.mxu0 %v86
    %143 = vmatpush.msra.mxu0 %v85
    %144 = vmatpush.msra.mxu0 %v84
    %145 = vmatpush.msra.mxu0 %v83
    %146 = vmatpush.msra.mxu0 %v82
    %147 = vmatpush.msra.mxu0 %v81
    %148 = vmatpush.msra.mxu0 %v80
    %149 = vmatpush.msra.mxu0 %v79
    %150 = vmatpush.msra.mxu0 %v78
    %151 = vmatpush.msra.mxu0 %v77
    %152 = vmatmul.f32.gmra.mxu0 %v56
    %v153 = vpop.f32.mrf.mxu0
    %v154 = vadd.f32 %v131, %v153
    %155 = vmatmul.f32.gmra.mxu0 %v59
    %v156 = vpop.f32.mrf.mxu0
    %v157 = vadd.f32 %v134, %v156
    %158 = vdwg.mxu0
    %159 = vmatpush.msra.mxu0 %v108
    %160 = vmatpush.msra.mxu0 %v107
    %161 = vmatpush.msra.mxu0 %v106
    %162 = vmatpush.msra.mxu0 %v105
    %163 = vmatpush.msra.mxu0 %v104
    %164 = vmatpush.msra.mxu0 %v103
    %165 = vmatpush.msra.mxu0 %v102
    %166 = vmatpush.msra.mxu0 %v101
    %167 = vmatpush.msra.mxu0 %v100
    %168 = vmatpush.msra.mxu0 %v99
    %169 = vmatpush.msra.mxu0 %v98
    %170 = vmatpush.msra.mxu0 %v97
    %171 = vmatpush.msra.mxu0 %v96
    %172 = vmatpush.msra.mxu0 %v95
    %173 = vmatpush.msra.mxu0 %v94
    %174 = vmatpush.msra.mxu0 %v93
    %175 = vmatmul.f32.gmra.mxu0 %v57
    %v176 = vpop.f32.mrf.mxu0
    %v177 = vadd.f32 %v154, %v176
    %178 = vmatmul.f32.gmra.mxu0 %v60
    %v179 = vpop.f32.mrf.mxu0
    %v180 = vadd.f32 %v157, %v179
    %181 = vdwg.mxu0
    %182 = vst [vmem:[#allocation2] sm:$0xff] %v177
    %183 = vst [vmem:[#allocation2 + $0x8] sm:$0x3f] %v180
    %v184 = vld [vmem:[#allocation2] sm:$0xff]
    %v185 = vld [vmem:[#allocation2 + $0x8] sm:$0x3f]
    %v186 = vmul.f32 %v184, %v184
    %vm187 = vcmask 523264
    %v188 = vsel %vm187, %v186, 0.0
    %189 = vadd.xlane.f32.xlu0 %v188
    %v190 = vpop.xlane.xlu0 %189
    %v191 = vmax.f32 %v190, 1e-24
    %v192 = vrsqrt.pop %v191
    %v193 = vmul.f32 %v192, %v191
    %v194 = vmul.f32 %v193, %v192
    %v195 = vmul.f32 0.5, %v194
    %v196 = vsub.f32 1.5, %v195
    %v197 = vmul.f32 %v192, %v196
    %vm198 = vweird.f32 %v191
    %vm199 = vweird.f32 %v192
    %vm200 = vmor %vm198, %vm199
    %v201 = vsel %vm200, %v192, %v197
    %v202 = vmul.f32 %v184, %v201
    %v203 = vmul.f32 %v185, %v185
    %205 = vrot.lane.b32.xlu0 %v203, 64
    %v206 = vpop.permute.xlu0 %205
    %vm208 = vcmask 521216
    %v209 = vsel %vm208, %v206, 0.0
    %210 = vadd.xlane.f32.xlu0 %v209
    %v211 = vpop.xlane.xlu0 %210
    %v212 = vmax.f32 %v211, 1e-24
    %v213 = vrsqrt.pop %v212
    %v214 = vmul.f32 %v213, %v212
    %v215 = vmul.f32 %v214, %v213
    %v216 = vmul.f32 0.5, %v215
    %v217 = vsub.f32 1.5, %v216
    %v218 = vmul.f32 %v213, %v217
    %vm219 = vweird.f32 %v212
    %vm220 = vweird.f32 %v213
    %vm221 = vmor %vm219, %vm220
    %v222 = vsel %vm221, %v213, %v218
    %v223 = vmul.f32 %v185, %v222
    %224 = vst.msk [vmem:[#allocation3] sm:$0xff] %vm187, 0.0
    %225 = vst.msk [vmem:[#allocation3 + $0x8] sm:$0xff] %vm187, 0.0
    %226 = vst.msk [vmem:[#allocation3 + $0x10] sm:$0xff] %vm187, 0.0
    %227 = vst.msk [vmem:[#allocation3 + $0x18] sm:$0xff] %vm187, 0.0
    %228 = vst.msk [vmem:[#allocation3 + $0x20] sm:$0xff] %vm187, 0.0
    %229 = vst.msk [vmem:[#allocation3 + $0x28] sm:$0xff] %vm187, 0.0
    %230 = vst.msk [vmem:[#allocation3 + $0x30] sm:$0xff] %vm187, 0.0
    %231 = vst.msk [vmem:[#allocation3 + $0x38] sm:$0xff] %vm187, 0.0
    %232 = vst.msk [vmem:[#allocation3 + $0x40] sm:$0xff] %vm187, 0.0
    %233 = vst.msk [vmem:[#allocation3 + $0x48] sm:$0xff] %vm187, 0.0
    %234 = vst.msk [vmem:[#allocation3 + $0x50] sm:$0xff] %vm187, 0.0
    %235 = vst.msk [vmem:[#allocation3 + $0x58] sm:$0xff] %vm187, 0.0
    %236 = vst.msk [vmem:[#allocation3 + $0x60] sm:$0xff] %vm187, 0.0
    %237 = vst.msk [vmem:[#allocation3 + $0x68] sm:$0xff] %vm187, 0.0
    %238 = vst.msk [vmem:[#allocation3 + $0x70] sm:$0xff] %vm187, 0.0
    %239 = vst.msk [vmem:[#allocation3 + $0x78] sm:$0xff] %vm187, 0.0
    %241 = vrot.lane.b32.xlu0 %v223, 64
    %v242 = vpop.permute.xlu0 %241
    %244 = vst.msk [vmem:[#allocation3] sm:$0x3f] %vm208, %v242
    %v245 = vld [vmem:[#allocation3] sm:$0xff]
    %v246 = vld [vmem:[#allocation3 + $0x8] sm:$0xff]
    %v247 = vld [vmem:[#allocation3 + $0x10] sm:$0xff]
    %v248 = vld [vmem:[#allocation3 + $0x18] sm:$0xff]
    %v249 = vld [vmem:[#allocation3 + $0x20] sm:$0xff]
    %v250 = vld [vmem:[#allocation3 + $0x28] sm:$0xff]
    %v251 = vld [vmem:[#allocation3 + $0x30] sm:$0xff]
    %v252 = vld [vmem:[#allocation3 + $0x38] sm:$0xff]
    %v253 = vld [vmem:[#allocation3 + $0x40] sm:$0xff]
    %v254 = vld [vmem:[#allocation3 + $0x48] sm:$0xff]
    %v255 = vld [vmem:[#allocation3 + $0x50] sm:$0xff]
    %v256 = vld [vmem:[#allocation3 + $0x58] sm:$0xff]
    %v257 = vld [vmem:[#allocation3 + $0x60] sm:$0xff]
    %v258 = vld [vmem:[#allocation3 + $0x68] sm:$0xff]
    %v259 = vld [vmem:[#allocation3 + $0x70] sm:$0xff]
    %v260 = vld [vmem:[#allocation3 + $0x78] sm:$0xff]
    %v262 = vsel %vm187, %v202, 0
    %v265 = vsel %vm187, %v245, 0
    %v268 = vsel %vm187, %v246, 0
    %v271 = vsel %vm187, %v247, 0
    %v274 = vsel %vm187, %v248, 0
    %v277 = vsel %vm187, %v249, 0
    %v280 = vsel %vm187, %v250, 0
    %v283 = vsel %vm187, %v251, 0
    %v286 = vsel %vm187, %v252, 0
    %v289 = vsel %vm187, %v253, 0
    %v292 = vsel %vm187, %v254, 0
    %v295 = vsel %vm187, %v255, 0
    %v298 = vsel %vm187, %v256, 0
    %v301 = vsel %vm187, %v257, 0
    %v304 = vsel %vm187, %v258, 0
    %v307 = vsel %vm187, %v259, 0
    %v310 = vsel %vm187, %v260, 0
    %312 = vmatpush.xpose.msra.mxu0 %v310
    %313 = vmatpush.xpose.msra.mxu0 %v307
    %314 = vmatpush.xpose.msra.mxu0 %v304
    %315 = vmatpush.xpose.msra.mxu0 %v301
    %316 = vmatpush.xpose.msra.mxu0 %v298
    %317 = vmatpush.xpose.msra.mxu0 %v295
    %318 = vmatpush.xpose.msra.mxu0 %v292
    %319 = vmatpush.xpose.msra.mxu0 %v289
    %320 = vmatpush.xpose.msra.mxu0 %v286
    %321 = vmatpush.xpose.msra.mxu0 %v283
    %322 = vmatpush.xpose.msra.mxu0 %v280
    %323 = vmatpush.xpose.msra.mxu0 %v277
    %324 = vmatpush.xpose.msra.mxu0 %v274
    %325 = vmatpush.xpose.msra.mxu0 %v271
    %326 = vmatpush.xpose.msra.mxu0 %v268
    %327 = vmatpush.xpose.msra.mxu0 %v265
    %328 = vmatmul.f32.gmra.mxu0 %v262
    %v329 = vpop.f32.mrf.mxu0
    %v330 = vadd.f32 0.0, %v329
    %331 = vdwg.mxu0
    %s332 = sld [smem:[#allocation4]]
    %v333 = vstv %s332
    %v334 = vmul.f32 %v330, %v333
    %v335 = vlaneseq
    %v336 = vand.u32 %v335, 127
    %vm337 = vcmp.lt.s32.totalorder %v336, 6
    %v338 = vsel %vm337, %v334, -1e+30
    %339 = vmax.xlane.f32.xlu0 %v338
    %v340 = vpop.xlane.xlu0 %339
    %vm341 = vcmp.eq.f32.partialorder %v338, %v340
    %v342 = vsel %vm341, %v336, 128
    %v343 = vand.u32 %v342, 65535
    %v344 = vshra.s32 %v342, 16
    %v345 = vcvt.s32.f32 %v343
    %v346 = vcvt.s32.f32 %v344
    %347 = vmin.xlane.f32.xlu0 %v346
    %v348 = vpop.xlane.xlu0 %347
    %vm349 = vcmp.eq.f32.partialorder %v346, %v348
    %v350 = vsel %vm349, %v345, inf
    %351 = vmin.xlane.f32.xlu0 %v350
    %v352 = vpop.xlane.xlu0 %351
    %v353 = vcvt.f32.s32 %v352
    %v354 = vcvt.f32.s32 %v348
    %v355 = vshll.u32 %v354, 16
    %v356 = vadd.s32 %v355, %v353
    %v357 = vsub.f32 %v338, %v340
    %v358 = vmul.f32 %v357, 1.442695
    %v359 = vpow.pop %v358
    %360 = vadd.xlane.f32.xlu0 %v359
    %v361 = vpop.xlane.xlu0 %360
    %v362 = vrcp.pop %v361
    %v363 = vmul.f32 %v361, %v362
    %v364 = vsub.f32 1.0, %v363
    %v365 = vmul.f32 %v362, %v364
    %v366 = vadd.f32 %v362, %v365
    %vm367 = vweird.f32 %v361
    %vm368 = vweird.f32 %v362
    %vm369 = vmor %vm367, %vm368
    %v370 = vsel %vm369, %v362, %v366
    %v371 = vand.u32 2147483647, %v361
    %vm372 = vcmp.eq.f32.partialorder %v371, 8.507059e+37
    %v373 = vand.u32 %v361, 2147483648
    %v374 = vor.u32 1.1754944e-38, %v373
    %v375 = vsel %vm372, %v374, %v370
    %v376 = vmul.f32 %v359, %v375
    %vm377 = vcmask 7168
    %378 = vst.msk [vmem:[%s4] sm:$0xff] %vm377, %v356
    %379 = vst [vmem:[#allocation10] sm:$0xff] %v376
    %380 = vst.msk [vmem:[#allocation11] sm:$0xff] %vm187, %v202
    // Predicated region
    $region26: #{tpu_custom_call.1} parent=1 // pred_check
      _
    $region27: #{tpu_custom_call.1} parent=1 // pred_check_branch
      %382 = sbr.rel (0) target = $region29
    $region28: #{tpu_custom_call.1} parent=1 // pred_region
      _
    $region29: #{tpu_custom_call.1} parent=1 // pred_fallthru
      _
    // Predicated region
    $region30: #{tpu_custom_call.1} parent=1 // pred_check
      _
    $region31: #{tpu_custom_call.1} parent=1 // pred_check_branch
      %384 = sbr.rel (0) target = $region33
    $region32: #{tpu_custom_call.1} parent=1 // pred_region
      %386 = vsyncadd [#allocation7], 0
      %s388 = sshll.u32 [#allocation10], 4
      %s389 = int_to_ptr.vmem [resolvable:$true] %s388
      %s390 = sshll.u32 %s5, 4
      %s391 = int_to_ptr.hbm [resolvable:$true] %s390
      %393 = dma.vmem_to_hbm [thread:$0]  %s389, 128, %s391, [#allocation7]
    $region33: #{tpu_custom_call.1} parent=1 // pred_fallthru
      _
    // Predicated region
    $region34: #{tpu_custom_call.1} parent=1 // pred_check
      _
    $region35: #{tpu_custom_call.1} parent=1 // pred_check_branch
      %395 = sbr.rel (0) target = $region37
    $region36: #{tpu_custom_call.1} parent=1 // pred_region
      %397 = vsyncadd [#allocation12], 0
      %s399 = sshll.u32 [#allocation11], 4
      %s400 = int_to_ptr.vmem [resolvable:$true] %s399
      %s401 = sshll.u32 %s6, 4
      %s402 = int_to_ptr.hbm [resolvable:$true] %s401
      %404 = dma.vmem_to_hbm [thread:$0]  %s400, 128, %s402, [#allocation12]
    $region37: #{tpu_custom_call.1} parent=1 // pred_fallthru
      _
    // Predicated region
    $region38: #{tpu_custom_call.1} parent=1 // pred_check
      _
    $region39: #{tpu_custom_call.1} parent=1 // pred_check_branch
      %406 = sbr.rel (0) target = $region41
    $region40: #{tpu_custom_call.1} parent=1 // pred_region
      _
    $region41: #{tpu_custom_call.1} parent=1 // pred_fallthru
      _
    // Predicated region
    $region42: #{tpu_custom_call.1} parent=1 // pred_check
      _
    $region43: #{tpu_custom_call.1} parent=1 // pred_check_branch
      %408 = sbr.rel (0) target = $region45
    $region44: #{tpu_custom_call.1} parent=1 // pred_region
      %410 = dma.done [#allocation7], 128
    $region45: #{tpu_custom_call.1} parent=1 // pred_fallthru
      _
    // Predicated region
    $region46: #{tpu_custom_call.1} parent=1 // pred_check
      _
    $region47: #{tpu_custom_call.1} parent=1 // pred_check_branch
      %412 = sbr.rel (0) target = $region49
    $region48: #{tpu_custom_call.1} parent=1 // pred_region
      %414 = dma.done [#allocation12], 128
    $region49: #{tpu_custom_call.1} parent=1 // pred_fallthru
      _
    %415 = vsyncpa [#allocation6], 1
    %416 = vsyncpa [#allocation9], 1
    %417 = vsyncpa [#allocation7], 1
    %418 = vsyncpa [#allocation12], 1

</llo_original>
